<compile_context>
chip_gen: v7x
topology: tpu7x:2x2x1
jax: 0.10.0
libtpu: 0.0.40
codegen_flags: <defaults>
</compile_context>

<pallas_src>
import functools

import jax
import jax.numpy as jnp
from jax.experimental import pallas as pl
from jax.experimental.pallas import tpu as pltpu


# ---------------------------------------------------------------------------
# VMEM budgeting (generation aware)
# ---------------------------------------------------------------------------
def _vmem_limit_bytes():
    """Scoped-VMEM limit from the actual chip (v5e/v6e: 128 MiB physical,
    v7x: 64 MiB per TensorCore). ~75% leaves headroom for compiler scratch."""
    try:
        cap = int(pltpu.get_tpu_info().vmem_capacity_bytes)
    except Exception:  # interpret mode / older jax -- safe for every TPU gen
        cap = 64 * 1024 * 1024
    return max(16 * 1024 * 1024, min(int(cap * 0.75), 112 * 1024 * 1024))


# ---------------------------------------------------------------------------
# Kernel A0: single-pass BN batch statistics (per-channel sum / sum-of-squares)
#   grid = (N,), reduction axis -> resident (1, C, 1) accumulators.
# ---------------------------------------------------------------------------
def _stats_flat_kernel(x_ref, sum_ref, sqs_ref):
    @pl.when(pl.program_id(0) == 0)
    def _():
        sum_ref[...] = jnp.zeros_like(sum_ref)
        sqs_ref[...] = jnp.zeros_like(sqs_ref)

    x = x_ref[...].astype(jnp.float32)                     # (1, C, HW)
    sum_ref[...] += jnp.sum(x, axis=2, keepdims=True)      # lane reduction
    sqs_ref[...] += jnp.sum(x * x, axis=2, keepdims=True)


# ---------------------------------------------------------------------------
# Kernel A1 (primary, fused, flat layout):
#   s  = x*sa + sb                (per-channel BN scale/shift * weight_bn)
#   y  = max_c(s)                 (channel max, flat spatial layout)
#   ys = sigmoid(conv7x7(y))      (conv done in the flat layout, see below)
#   out = sigmoid(s) * x * ys
# One x read + one out write per batch element; everything else stays in VMEM.
# ---------------------------------------------------------------------------
def _fused_flat_kernel(x_ref, sa_ref, sb_ref, mask_ref, w_ref, o_ref, yfp_ref,
                       *, width):
    W = width
    HW = x_ref.shape[2]
    PAD = 3 * W + 3                       # covers row shifts +-3W and col +-3

    x = x_ref[...].astype(jnp.float32)    # (1, C, HW)  -- single HBM read
    s = x * sa_ref[...] + sb_ref[...]     # (1, C, 1) broadcast, pure VPU
    y = jnp.max(s, axis=1, keepdims=True)  # (1, 1, HW) channel max

    # Zero-padded flat y: yfp[PAD + q] = y_flat[q]; pads absorb the row
    # under/overflow of the 7x7 window.
    yfp_ref[...] = jnp.zeros_like(yfp_ref)
    yfp_ref[:, PAD:PAD + HW] = y[0]       # (1, HW)

    # 7x7 conv in flat layout:
    #   out[p] = sum_{ki,kj} w[ki,kj] * Y(i+ki-3, j+kj-3),  p = i*W + j
    # Valid taps read yfp at static offset PAD + (ki-3)*W + (kj-3); taps whose
    # column leaves [0, W) are zeroed by the per-kj mask (host precomputed).
    acc = jnp.zeros((1, HW), jnp.float32)
    for kj in range(7):
        acc_kj = jnp.zeros((1, HW), jnp.float32)
        for ki in range(7):
            start = PAD + (ki - 3) * W + (kj - 3)
            acc_kj = acc_kj + w_ref[ki * 7 + kj] * yfp_ref[:, start:start + HW]
        acc = acc + mask_ref[kj:kj + 1, :] * acc_kj
    ys = jax.nn.sigmoid(acc)              # (1, HW) -> broadcast over channels

    o_ref[...] = (jax.nn.sigmoid(s) * x * ys).astype(o_ref.dtype)


# ---------------------------------------------------------------------------
# Fallback kernels (planes too large for VMEM): proven two-kernel NCHW path.
# Costs one extra HBM read of x (the gate recomputes s) + the tiny y roundtrip.
# ---------------------------------------------------------------------------
def _bn_max_kernel(x_ref, sa_ref, sb_ref, y_ref):
    s = x_ref[...].astype(jnp.float32) * sa_ref[...] + sb_ref[...]
    y_ref[...] = jnp.max(s, axis=1, keepdims=True)          # (1, 1, TH, W)


def _conv_gate_kernel(yp_ref, x_ref, sa_ref, sb_ref, w_ref, o_ref):
    TH = o_ref.shape[2]
    W = o_ref.shape[3]

    row0 = pl.program_id(1) * TH
    if TH % 8 == 0:                        # static python branch
        row0 = pl.multiple_of(row0, 8)
    ywin = yp_ref[0, pl.ds(row0, TH + 6), :]                 # (TH+6, W+6)

    acc = jnp.zeros((TH, W), jnp.float32)
    for kj in range(7):                    # 7 lane shifts, reused over ki
        band = ywin[:, kj:kj + W]
        for ki in range(7):                # cheap sublane offsets
            acc = acc + w_ref[ki * 7 + kj] * band[ki:ki + TH, :]
    ys = jax.nn.sigmoid(acc)[None, None, :, :]

    x = x_ref[...].astype(jnp.float32)
    s = x * sa_ref[...] + sb_ref[...]      # recompute gate (no HBM roundtrip)
    o_ref[...] = (jax.nn.sigmoid(s) * x * ys).astype(o_ref.dtype)


# ---------------------------------------------------------------------------
# Wrappers
# ---------------------------------------------------------------------------
def _scale_shift(x, gamma, beta, eps, vmem_limit, use_pallas_stats):
    """Fold train-mode BatchNorm (batch stats) and weight_bn into s = x*sa+sb."""
    N, C, H, W = x.shape
    n_red = N * H * W
    if use_pallas_stats:
        HW = H * W
        x_flat = x.reshape(N, C, HW)       # free, contiguous view
        ssum, ssq = pl.pallas_call(
            _stats_flat_kernel,
            out_shape=(jax.ShapeDtypeStruct((1, C, 1), jnp.float32),
                       jax.ShapeDtypeStruct((1, C, 1), jnp.float32)),
            grid=(N,),
            in_specs=[pl.BlockSpec((1, C, HW), lambda n: (n, 0, 0))],
            out_specs=(pl.BlockSpec((1, C, 1), lambda n: (0, 0, 0)),
                       pl.BlockSpec((1, C, 1), lambda n: (0, 0, 0))),
            compiler_params=pltpu.CompilerParams(
                dimension_semantics=("arbitrary",),      # reduction axis
                vmem_limit_bytes=vmem_limit),
        )(x_flat)
        sum_x = ssum[0, :, 0]
        sum_xx = ssq[0, :, 0]
    else:
        # Plane too big for a single VMEM block; XLA normally fuses these two
        # sibling reductions into one HBM pass.
        xf = x.astype(jnp.float32)
        sum_x = jnp.sum(xf, axis=(0, 2, 3))
        sum_xx = jnp.sum(xf * xf, axis=(0, 2, 3))

    mean = sum_x / n_red
    var = jnp.maximum(sum_xx / n_red - mean * mean, 0.0)    # biased, train mode
    a = gamma * jax.lax.rsqrt(var + eps)
    b = beta - mean * a
    wbn = jnp.abs(gamma) / jnp.sum(jnp.abs(gamma))
    sa = (a * wbn).astype(jnp.float32)
    sb = (b * wbn).astype(jnp.float32)
    return sa, sb


def _cae_fused_flat(x, sa, sb, w_flat, vmem_limit, out_dtype):
    N, C, H, W = x.shape
    HW = H * W
    PAD = 3 * W + 3

    x_flat = x.reshape(N, C, HW)                             # free reshape
    sa3 = sa.reshape(1, C, 1)
    sb3 = sb.reshape(1, C, 1)

    # Host-built column-validity masks for the flat 7x7 conv (tiny).
    j_idx = jnp.tile(jnp.arange(W, dtype=jnp.int32), H)      # (HW,)
    masks = jnp.stack(
        [((j_idx + (kj - 3) >= 0) & (j_idx + (kj - 3) < W)).astype(jnp.float32)
         for kj in range(7)], axis=0)                        # (7, HW)

    kernel = functools.partial(_fused_flat_kernel, width=W)

    out_flat = pl.pallas_call(
        kernel,
        out_shape=jax.ShapeDtypeStruct((N, C, HW), out_dtype),
        grid=(N,),                      # batches split across v7x TensorCores
        in_specs=[
            pl.BlockSpec((1, C, HW), lambda n: (n, 0, 0)),   # x (read once)
            pl.BlockSpec((1, C, 1), lambda n: (0, 0, 0)),    # sa
            pl.BlockSpec((1, C, 1), lambda n: (0, 0, 0)),    # sb
            pl.BlockSpec((7, HW), lambda n: (0, 0)),         # conv col masks
            pl.BlockSpec(memory_space=pltpu.MemorySpace.SMEM),  # 49 weights
        ],
        out_specs=pl.BlockSpec((1, C, HW), lambda n: (n, 0, 0)),
        scratch_shapes=[pltpu.VMEM((1, HW + 2 * PAD), jnp.float32)],
        compiler_params=pltpu.CompilerParams(
            dimension_semantics=("parallel",),
            vmem_limit_bytes=vmem_limit),
    )(x_flat, sa3, sb3, masks, w_flat)
    # TODO(synk): with N == 1 the fused grid has a single point and one v7x
    # TensorCore idles; an extra parallel split would need an H/W halo path.
    return out_flat.reshape(N, C, H, W)


def _choose_h_tile(N, C, H, W, itemsize, budget_bytes):
    """Largest H-tile (multiple of 8 dividing H, or H itself) whose (C,TH,W)
    tile fits the budget; among fitting tiles prefer >= 8 grid points so both
    v7x TensorCores stay fed."""
    cands = sorted({th for th in range(8, H + 1, 8) if H % th == 0} | {H},
                   reverse=True)
    fitting = [th for th in cands if C * th * W * itemsize <= budget_bytes]
    if not fitting:
        # TODO(synk): pathological H (no multiple-of-8 divisor fits): needs a
        # masked tail tile (grid=pl.cdiv) to stay inside the budget.
        return min(cands)
    for th in fitting:
        if N * (H // th) >= 8:
            return th
    return fitting[0]


def _cae_tiled_nchw(x, sa, sb, w_flat, vmem_limit, out_dtype, tile_h=None):
    """Fallback for planes too large to hold in VMEM (two kernels, H-tiled)."""
    N, C, H, W = x.shape
    itemsize = jnp.dtype(x.dtype).itemsize

    # kernel-2 VMEM ~ 2*(x tile) + 2*(out tile) + 2*yp + padded sa/sb + slack.
    fixed = 2 * (H + 6) * (W + 6) * 4 + 4 * C * 4096 + (2 << 20)
    budget = max((int(vmem_limit * 0.9) - fixed) // 4, 1 << 20)

    if tile_h is not None and H % tile_h == 0 and (tile_h % 8 == 0 or tile_h == H):
        TH = tile_h
    else:
        TH = _choose_h_tile(N, C, H, W, itemsize, budget)
    n_h = H // TH

    cparams = pltpu.CompilerParams(
        dimension_semantics=("parallel", "parallel"),
        vmem_limit_bytes=vmem_limit)

    sa4 = sa.reshape(1, C, 1, 1)
    sb4 = sb.reshape(1, C, 1, 1)

    # ---- kernel 1: y = max_c(x * sa + sb) ----------------------------------
    y = pl.pallas_call(
        _bn_max_kernel,
        out_shape=jax.ShapeDtypeStruct((N, 1, H, W), jnp.float32),
        grid=(N, n_h),
        in_specs=[
            pl.BlockSpec((1, C, TH, W), lambda n, h: (n, 0, h, 0)),
            pl.BlockSpec((1, C, 1, 1), lambda n, h: (0, 0, 0, 0)),
            pl.BlockSpec((1, C, 1, 1), lambda n, h: (0, 0, 0, 0)),
        ],
        out_specs=pl.BlockSpec((1, 1, TH, W), lambda n, h: (n, 0, h, 0)),
        compiler_params=cparams,
    )(x, sa4, sb4)

    # tiny single-channel map padded for the 7x7 conv (padding=3) -- glue
    yp = jnp.pad(y[:, 0], ((0, 0), (3, 3), (3, 3)))          # (N, H+6, W+6)

    # ---- kernel 2: conv7x7 + sigmoid + recomputed gate ---------------------
    out = pl.pallas_call(
        _conv_gate_kernel,
        out_shape=jax.ShapeDtypeStruct((N, C, H, W), out_dtype),
        grid=(N, n_h),
        in_specs=[
            pl.BlockSpec((1, H + 6, W + 6), lambda n, h: (n, 0, 0)),
            pl.BlockSpec((1, C, TH, W), lambda n, h: (n, 0, h, 0)),
            pl.BlockSpec((1, C, 1, 1), lambda n, h: (0, 0, 0, 0)),
            pl.BlockSpec((1, C, 1, 1), lambda n, h: (0, 0, 0, 0)),
            pl.BlockSpec(memory_space=pltpu.MemorySpace.SMEM),
        ],
        out_specs=pl.BlockSpec((1, C, TH, W), lambda n, h: (n, 0, h, 0)),
        compiler_params=cparams,
    )(yp, x, sa4, sb4, w_flat)
    return out


def cae_forward(x_nchw, gamma, beta, conv_w, eps=1e-5, tile_h=None,
                force_tiled=False, vmem_limit_bytes=None):
    """Pallas implementation of CAE.forward (== CASAE.forward), NCHW in/out.

    x_nchw : (N, C, H, W) float32 or bfloat16
    gamma, beta : (C,) BatchNorm2d affine params
    conv_w : (1, 1, 7, 7) conv weight (no bias)
    """
    # TODO(synk): only nn.BatchNorm2d train-mode batch statistics are
    # implemented (no running-mean/var eval path), matching the training
    # forward of the reference module.
    N, C, H, W = x_nchw.shape
    HW = H * W
    itemsize = jnp.dtype(x_nchw.dtype).itemsize
    out_dtype = x_nchw.dtype

    vmem_limit = int(vmem_limit_bytes) if vmem_limit_bytes else _vmem_limit_bytes()

    # Fused-path VMEM estimate: double-buffered x + out planes, the (7,HW)
    # masks, the padded-y scratch, sa/sb (~ceil(C/8)*4KiB each) and slack.
    pad = 3 * W + 3
    fixed = (2 * 8 * HW * 4 + 8 * (HW + 2 * pad) * 4
             + 4 * ((C + 7) // 8) * 4096 + (2 << 20))
    fused_fits = (4 * C * HW * itemsize + fixed) <= int(vmem_limit * 0.9)

    gamma = gamma.astype(jnp.float32)
    beta = beta.astype(jnp.float32)
    w_flat = conv_w.reshape(49).astype(jnp.float32)

    sa, sb = _scale_shift(x_nchw, gamma, beta, eps, vmem_limit,
                          use_pallas_stats=fused_fits)

    if fused_fits and not force_tiled:
        return _cae_fused_flat(x_nchw, sa, sb, w_flat, vmem_limit, out_dtype)
    return _cae_tiled_nchw(x_nchw, sa, sb, w_flat, vmem_limit, out_dtype,
                           tile_h=tile_h)


class CASAEPallas:
    """CASAE(in_planes) -> CAE(in_planes), Pallas-backed, deterministic params."""

    def __init__(self, channels, seed=1):
        k = jax.random.PRNGKey(seed)
        kg, kb, kw = jax.random.split(k, 3)
        self.gamma = 1.0 + 0.1 * jax.random.normal(kg, (channels,), jnp.float32)
        self.beta = 0.05 * jax.random.normal(kb, (channels,), jnp.float32)
        self.conv_w = 0.1 * jax.random.normal(kw, (1, 1, 7, 7), jnp.float32)

    def __call__(self, x_nchw, **kwargs):
        return cae_forward(x_nchw, self.gamma, self.beta, self.conv_w, **kwargs)


# ---------------------------- pure-JAX reference -----------------------------
def cae_reference(x, gamma, beta, conv_w, eps=1e-5):
    residual = x
    mean = jnp.mean(x, axis=(0, 2, 3), keepdims=True)
    var = jnp.mean((x - mean) ** 2, axis=(0, 2, 3), keepdims=True)
    xb = (x - mean) / jnp.sqrt(var + eps) * gamma[None, :, None, None] \
        + beta[None, :, None, None]
    wbn = jnp.abs(gamma) / jnp.sum(jnp.abs(gamma))
    s = xb * wbn[None, :, None, None]
    y = jnp.max(s, axis=1, keepdims=True)
    y = jax.lax.conv_general_dilated(
        y, conv_w, window_strides=(1, 1), padding=[(3, 3), (3, 3)],
        dimension_numbers=("NCHW", "OIHW", "NCHW"))
    ys = jax.nn.sigmoid(y)
    return jax.nn.sigmoid(s) * residual * ys


if __name__ == "__main__":
    # Small shapes consistent with a CASAE stage.
    N, C, H, W = 2, 8, 16, 16
    key = jax.random.PRNGKey(0)
    x = jax.random.normal(key, (N, C, H, W), jnp.float32)

    mod = CASAEPallas(C, seed=1)

    # primary path: fused, lane-dense flat layout
    out = jax.block_until_ready(mod(x))
    # fallback path: H-tiled two-kernel NCHW pipeline (exercised explicitly)
    out_tiled = jax.block_until_ready(mod(x, force_tiled=True, tile_h=8))

    ref = cae_reference(x, mod.gamma, mod.beta, mod.conv_w)

    assert out.shape == (N, C, H, W)
    assert jnp.allclose(out, ref, atol=5e-5, rtol=5e-5), \
        float(jnp.max(jnp.abs(out - ref)))
    assert jnp.allclose(out_tiled, ref, atol=5e-5, rtol=5e-5), \
        float(jnp.max(jnp.abs(out_tiled - ref)))

    print("KERNEL_OK")
</pallas_src>

<mosaic_0001>
module attributes {stable_mosaic.version = 11 : i64} {
  func.func @_stats_flat_kernel(%arg0: i32, %arg1: memref<1x8x256xf32, #tpu.memory_space<vmem>>, %arg2: memref<1x8x1xf32, #tpu.memory_space<vmem>>, %arg3: memref<1x8x1xf32, #tpu.memory_space<vmem>>) attributes {dimension_semantics = [#tpu.dimension_semantics<arbitrary>], iteration_bounds = array<i64: 2>, scalar_prefetch = 0 : i64, scratch_operands = 0 : i64, tpu.core_type = #tpu.core_type<tc>, window_params = [{transform_indices = @transform_0, window_bounds = array<i64: 1, 8, 256>}, {pipeline_mode = #tpu.pipeline_mode<synchronous>, transform_indices = @transform_1, window_bounds = array<i64: 1, 8, 1>}, {pipeline_mode = #tpu.pipeline_mode<synchronous>, transform_indices = @transform_2, window_bounds = array<i64: 1, 8, 1>}]} {
    %c0_i32 = arith.constant 0 : i32
    %0 = arith.cmpi eq, %arg0, %c0_i32 : i32
    %1 = arith.extui %0 : i1 to i32
    %c0_i32_0 = arith.constant 0 : i32
    %2 = arith.cmpi ne, %1, %c0_i32_0 : i32
    scf.if %2 {
      %cst_16 = arith.constant 0.000000e+00 : f32
      %15 = vector.broadcast %cst_16 : f32 to vector<1x8x1xf32>
      %c0_17 = arith.constant 0 : index
      %c0_18 = arith.constant 0 : index
      %c0_19 = arith.constant 0 : index
      %16 = vector.load %arg2[%c0_17, %c0_18, %c0_19] : memref<1x8x1xf32, #tpu.memory_space<vmem>>, vector<1x8x1xf32>
      tpu.vector_store %arg2[%c0_17, %c0_18, %c0_19], %15 {strides = array<i32>} : memref<1x8x1xf32, #tpu.memory_space<vmem>>, vector<1x8x1xf32>,
      %cst_20 = arith.constant 0.000000e+00 : f32
      %17 = vector.broadcast %cst_20 : f32 to vector<1x8x1xf32>
      %c0_21 = arith.constant 0 : index
      %c0_22 = arith.constant 0 : index
      %c0_23 = arith.constant 0 : index
      %18 = vector.load %arg3[%c0_21, %c0_22, %c0_23] : memref<1x8x1xf32, #tpu.memory_space<vmem>>, vector<1x8x1xf32>
      tpu.vector_store %arg3[%c0_21, %c0_22, %c0_23], %17 {strides = array<i32>} : memref<1x8x1xf32, #tpu.memory_space<vmem>>, vector<1x8x1xf32>,
    } else {
    }
    %c0 = arith.constant 0 : index
    %c0_1 = arith.constant 0 : index
    %c0_2 = arith.constant 0 : index
    %3 = vector.load %arg1[%c0, %c0_1, %c0_2] : memref<1x8x256xf32, #tpu.memory_space<vmem>>, vector<1x8x256xf32>
    %c0_3 = arith.constant 0 : index
    %c0_4 = arith.constant 0 : index
    %c0_5 = arith.constant 0 : index
    %4 = vector.load %arg2[%c0_3, %c0_4, %c0_5] : memref<1x8x1xf32, #tpu.memory_space<vmem>>, vector<1x8x1xf32>
    %cst = arith.constant dense<0.000000e+00> : vector<1x8xf32>
    %5 = vector.multi_reduction <add>, %3, %cst [2] : vector<1x8x256xf32> to vector<1x8xf32>
    %6 = vector.shape_cast %5 : vector<1x8xf32> to vector<1x8x1xf32>
    %7 = arith.addf %4, %6 : vector<1x8x1xf32>
    %c0_6 = arith.constant 0 : index
    %c0_7 = arith.constant 0 : index
    %c0_8 = arith.constant 0 : index
    %8 = vector.load %arg2[%c0_6, %c0_7, %c0_8] : memref<1x8x1xf32, #tpu.memory_space<vmem>>, vector<1x8x1xf32>
    tpu.vector_store %arg2[%c0_6, %c0_7, %c0_8], %7 {strides = array<i32>} : memref<1x8x1xf32, #tpu.memory_space<vmem>>, vector<1x8x1xf32>,
    %c0_9 = arith.constant 0 : index
    %c0_10 = arith.constant 0 : index
    %c0_11 = arith.constant 0 : index
    %9 = vector.load %arg3[%c0_9, %c0_10, %c0_11] : memref<1x8x1xf32, #tpu.memory_space<vmem>>, vector<1x8x1xf32>
    %10 = arith.mulf %3, %3 : vector<1x8x256xf32>
    %cst_12 = arith.constant dense<0.000000e+00> : vector<1x8xf32>
    %11 = vector.multi_reduction <add>, %10, %cst_12 [2] : vector<1x8x256xf32> to vector<1x8xf32>
    %12 = vector.shape_cast %11 : vector<1x8xf32> to vector<1x8x1xf32>
    %13 = arith.addf %9, %12 : vector<1x8x1xf32>
    %c0_13 = arith.constant 0 : index
    %c0_14 = arith.constant 0 : index
    %c0_15 = arith.constant 0 : index
    %14 = vector.load %arg3[%c0_13, %c0_14, %c0_15] : memref<1x8x1xf32, #tpu.memory_space<vmem>>, vector<1x8x1xf32>
    tpu.vector_store %arg3[%c0_13, %c0_14, %c0_15], %13 {strides = array<i32>} : memref<1x8x1xf32, #tpu.memory_space<vmem>>, vector<1x8x1xf32>,
    return
  }
  func.func @transform_0(%arg0: i32) -> (i32, i32, i32) {
    %c0_i32 = arith.constant 0 : i32
    %c0_i32_0 = arith.constant 0 : i32
    %c0_i32_1 = arith.constant 0 : i32
    return %arg0, %c0_i32, %c0_i32_0 : i32, i32, i32
  }
  func.func @transform_1(%arg0: i32) -> (i32, i32, i32) {
    %c0_i32 = arith.constant 0 : i32
    %c0_i32_0 = arith.constant 0 : i32
    %c0_i32_1 = arith.constant 0 : i32
    %c0_i32_2 = arith.constant 0 : i32
    return %c0_i32, %c0_i32_0, %c0_i32_1 : i32, i32, i32
  }
  func.func @transform_2(%arg0: i32) -> (i32, i32, i32) {
    %c0_i32 = arith.constant 0 : i32
    %c0_i32_0 = arith.constant 0 : i32
    %c0_i32_1 = arith.constant 0 : i32
    %c0_i32_2 = arith.constant 0 : i32
    return %c0_i32, %c0_i32_0, %c0_i32_1 : i32, i32, i32
  }
}

</mosaic_0001>

<llo_original>
// kernel: tpu_custom_call.1
$region0: #{tpu_custom_call.1}
  #allocation0 [shape = 'u32[]', space=smem, size = 0x4, offset = 0x4, fixed_abs, tag = 'smem constant byte address 0x4 - core index']
  #allocation1 [shape = 'u32[144,128]{1,0:T(1,128)}', space=vmem, size = 0x12000, scoped, tag = 'internal scratch']
  %s0 = inlined_call_operand.hbm [shape: f32[2,8,256], index: 0, kind: input, shape index: {}]
  %s1 = inlined_call_operand.vmem [shape: f32[1,8,1], index: 1, kind: output, shape index: {0}]
  %s2 = inlined_call_operand.vmem [shape: f32[1,8,1], index: 2, kind: output, shape index: {1}]
  %3 = xla_tuple %s1, %s2
  %s4 = sld [smem:[#allocation0]]
  $region53: #{tpu_custom_call.1} parent=0
    _
  %s6 = ssub.s32 1, %s4
  %s7 = scalar_select 0, %s6, %s4
  $region1: #{tpu_custom_call.1} parent=0
    #allocation2 [shape = 'u8[16384]{0}', space=vmem, size = 0x4000, scoped, tag = 'input window, operand 0']
    #allocation3 [shape = 's32[2]{0}', space=sflag, size = 0x8, scoped, tag = 'scoped memory for tpu_custom_call.1']
    %8 = vsyncpa [#allocation3], 0
    %s9 = scalar_lea.sflag [#allocation3], 1
    %10 = vsyncpa %s9, 0
    loop: start=0, step=1, limit=4
    $region2: #{tpu_custom_call.1} parent=1 // loop_pre_header
      _
    $region3: #{tpu_custom_call.1} parent=1 // loop_header
      %s12 = sphi 0, %s16
      %p13 = scmp.ge.s32.totalorder %s12, 4
      %s22 = sphi 0, %s24
      %s25 = sphi 0, %s22
      %s26 = sphi 0, %s25
      %s42 = sphi 0, %s26
      %s46 = sphi 0, %s46
      %s48 = sphi 0, %s46
      %s49 = sphi 0, %s48
      %s63 = sphi 0, %s49
      %s67 = sphi 0, %s67
      %s69 = sphi 0, %s67
      %s70 = sphi 0, %s69
      %s84 = sphi 0, %s70
    $region4: #{tpu_custom_call.1} parent=1 // loop_header_branch
      %15 = sbr.rel (%p13) target = $region8
    $region5: #{tpu_custom_call.1} parent=1 // loop_body
      %s17 = ssub.s32 %s12, 1
      %s18 = ssub.s32 %s12, 2
      %s19 = sadd.s32 %s12, 1
      %s20 = ssub.s32 %s12, %s19
      %p21 = scmp.eq.s32.totalorder %s20, 0
      %s23 = sadd.s32 %s22, 1
      %s24 = scalar_select %p21, %s22, %s23
      %p27 = pneg %p21
      %p28 = scmp.eq.s32.totalorder %s12, 1
      %p29 = por %p27, %p28
      %p30 = scmp.ne.s32.totalorder %s22, %s25
      %p31 = scmp.eq.s32.totalorder %s12, 0
      %p32 = por %p30, %p31
      %p33 = scmp.ne.s32.totalorder %s22, %s25
      %p34 = scmp.eq.s32.totalorder %s17, 1
      %p35 = por %p33, %p34
      %p36 = scmp.ne.s32.totalorder %s25, %s26
      %p37 = scmp.eq.s32.totalorder %s17, 0
      %p38 = por %p36, %p37
      %p39 = scmp.ne.s32.totalorder %s25, %s26
      %p40 = scmp.eq.s32.totalorder %s18, 1
      %p41 = por %p39, %p40
      %p43 = scmp.ne.s32.totalorder %s26, %s42
      %p44 = scmp.eq.s32.totalorder %s18, 0
      %p45 = por %p43, %p44
      %s47 = sadd.s32 %s46, 1
      %p50 = scmp.eq.s32.totalorder %s12, 1
      %p51 = scmp.ne.s32.totalorder %s46, %s48
      %p52 = scmp.eq.s32.totalorder %s12, 0
      %p53 = por %p51, %p52
      %p54 = scmp.ne.s32.totalorder %s46, %s48
      %p55 = scmp.eq.s32.totalorder %s17, 1
      %p56 = por %p54, %p55
      %p57 = scmp.ne.s32.totalorder %s48, %s49
      %p58 = scmp.eq.s32.totalorder %s17, 0
      %p59 = por %p57, %p58
      %p60 = scmp.ne.s32.totalorder %s48, %s49
      %p61 = scmp.eq.s32.totalorder %s18, 1
      %p62 = por %p60, %p61
      %p64 = scmp.ne.s32.totalorder %s49, %s63
      %p65 = scmp.eq.s32.totalorder %s18, 0
      %p66 = por %p64, %p65
      %s68 = sadd.s32 %s67, 1
      %p71 = scmp.eq.s32.totalorder %s12, 1
      %p72 = scmp.ne.s32.totalorder %s67, %s69
      %p73 = scmp.eq.s32.totalorder %s12, 0
      %p74 = por %p72, %p73
      %p75 = scmp.ne.s32.totalorder %s67, %s69
      %p76 = scmp.eq.s32.totalorder %s17, 1
      %p77 = por %p75, %p76
      %p78 = scmp.ne.s32.totalorder %s69, %s70
      %p79 = scmp.eq.s32.totalorder %s17, 0
      %p80 = por %p78, %p79
      %p81 = scmp.ne.s32.totalorder %s69, %s70
      %p82 = scmp.eq.s32.totalorder %s18, 1
      %p83 = por %p81, %p82
      %p85 = scmp.ne.s32.totalorder %s70, %s84
      %p86 = scmp.eq.s32.totalorder %s18, 0
      %p87 = por %p85, %p86
      %p88 = scmp.le.s32.totalorder 1, %s12
      %p89 = scmp.lt.s32.totalorder %s12, 3
      %p90 = pnand %p88, %p89
      %p91 = pneg %p90
      // Predicated region
      $region9: #{tpu_custom_call.1} parent=5 // pred_check
        _
      $region10: #{tpu_custom_call.1} parent=5 // pred_check_branch
        %93 = sbr.rel (%p90) target = $region12
      $region11: #{tpu_custom_call.1} parent=5 // pred_region
        %s94 = ssub.s32 %s12, 1
      $region12: #{tpu_custom_call.1} parent=5 // pred_fallthru
        _
      %p95 = scmp.lt.s32.totalorder %s12, 2
      // Predicated region
      $region13: #{tpu_custom_call.1} parent=5 // pred_check
        %p96 = pneg %p95
      $region14: #{tpu_custom_call.1} parent=5 // pred_check_branch
        %98 = sbr.rel (%p96) target = $region16
      $region15: #{tpu_custom_call.1} parent=5 // pred_region
        // Predicated region
        $region17: #{tpu_custom_call.1} parent=15 // pred_check
          %p99 = pneg %p32
        $region18: #{tpu_custom_call.1} parent=15 // pred_check_branch
          %101 = sbr.rel (%p99) target = $region20
        $region19: #{tpu_custom_call.1} parent=15 // pred_region
          %s102 = sand.u32 %s22, 1
          %s103 = scalar_lea.sflag [#allocation3], %s102
          %s104 = sand.u32 %s22, 1
          %s105 = smul.addr %s104, 16
          %s106 = scalar_lea.vmem [#allocation2], %s105
          %s108 = ssub.s32 256, 256
          %109 = vsyncadd %s103, %s108
          %s110 = smul.addr %s12, 2
          %s111 = smul.addr %s110, 128
          %s112 = scalar_lea.hbm %s0, %s111
          %s114 = sshll.u32 %s106, 4
          %s115 = int_to_ptr.vmem [resolvable:$true] %s114
          %117 = dma.hbm_to_vmem [thread:$0]  %s112, 256, %s115, %s103
        $region20: #{tpu_custom_call.1} parent=15 // pred_fallthru
          _
      $region16: #{tpu_custom_call.1} parent=5 // pred_fallthru
        _
      %p118 = scmp.le.s32.totalorder 1, %s12
      %p119 = scmp.lt.s32.totalorder %s12, 3
      %p120 = pnand %p118, %p119
      %p121 = pneg %p120
      // Predicated region
      $region21: #{tpu_custom_call.1} parent=5 // pred_check
        _
      $region22: #{tpu_custom_call.1} parent=5 // pred_check_branch
        %123 = sbr.rel (%p120) target = $region24
      $region23: #{tpu_custom_call.1} parent=5 // pred_region
        %s124 = ssub.s32 %s12, 1
        %s125 = sand.u32 %s25, 1
        %s126 = scalar_lea.sflag [#allocation3], %s125
        %s127 = sand.u32 %s25, 1
        %s128 = smul.addr %s127, 16
        %s129 = scalar_lea.vmem [#allocation2], %s128
        // Predicated region
        $region25: #{tpu_custom_call.1} parent=23 // pred_check
          %p130 = pneg %p38
        $region26: #{tpu_custom_call.1} parent=23 // pred_check_branch
          %132 = sbr.rel (%p130) target = $region28
        $region27: #{tpu_custom_call.1} parent=23 // pred_region
          %133 = dma.done %s126, 256
        $region28: #{tpu_custom_call.1} parent=23 // pred_fallthru
          _
        %s134 = sand.u32 %s25, 1
        %s135 = scalar_lea.sflag [#allocation3], %s134
        %s136 = sand.u32 %s25, 1
        %s137 = smul.addr %s136, 16
        %s138 = scalar_lea.vmem [#allocation2], %s137
        %p139 = pneg %p38
        %p140 = pneg %p35
        %p141 = pneg %p59
        %p142 = pneg %p56
        %p143 = pneg %p80
        %p144 = pneg %p77
        %p145 = scmp.eq.s32.totalorder %s17, 0
        // Predicated region
        $region29: #{tpu_custom_call.1} parent=23 // pred_check
          %p146 = pneg %p145
        $region30: #{tpu_custom_call.1} parent=23 // pred_check_branch
          %148 = sbr.rel (%p146) target = $region32
        $region31: #{tpu_custom_call.1} parent=23 // pred_region
          %vm149 = vcmask 7168
          %150 = vst.msk [vmem:[%s1] sm:$0xff] %vm149, 0.0
          %151 = vst.msk [vmem:[%s2] sm:$0xff] %vm149, 0.0
        $region32: #{tpu_custom_call.1} parent=23 // pred_fallthru
          _
        %v152 = vld [vmem:[%s129] sm:$0xff]
        %v153 = vld [vmem:[%s129 + $0x8] sm:$0xff]
        %v154 = vld [vmem:[%s1] sm:$0xff]
        %v155 = vadd.f32 %v152, %v153
        %156 = vadd.xlane.f32.xlu0 %v155
        %v157 = vpop.xlane.xlu0 %156
        %v158 = vadd.f32 %v154, %v157
        %vm159 = vcmask 7168
        %160 = vst.msk [vmem:[%s1] sm:$0xff] %vm159, %v158
        %v161 = vld [vmem:[%s2] sm:$0xff]
        %v162 = vmul.f32 %v152, %v152
        %v163 = vmul.f32 %v153, %v153
        %v164 = vadd.f32 %v162, %v163
        %165 = vadd.xlane.f32.xlu0 %v164
        %v166 = vpop.xlane.xlu0 %165
        %v167 = vadd.f32 %v161, %v166
        %168 = vst.msk [vmem:[%s2] sm:$0xff] %vm159, %v167
        // Predicated region
        $region33: #{tpu_custom_call.1} parent=23 // pred_check
          %p169 = pneg %p56
        $region34: #{tpu_custom_call.1} parent=23 // pred_check_branch
          %171 = sbr.rel (%p169) target = $region36
        $region35: #{tpu_custom_call.1} parent=23 // pred_region
          _
        $region36: #{tpu_custom_call.1} parent=23 // pred_fallthru
          _
        // Predicated region
        $region37: #{tpu_custom_call.1} parent=23 // pred_check
          %p172 = pneg %p77
        $region38: #{tpu_custom_call.1} parent=23 // pred_check_branch
          %174 = sbr.rel (%p172) target = $region40
        $region39: #{tpu_custom_call.1} parent=23 // pred_region
          _
        $region40: #{tpu_custom_call.1} parent=23 // pred_fallthru
          _
        // Predicated region
        $region41: #{tpu_custom_call.1} parent=23 // pred_check
          %p175 = pneg %p56
        $region42: #{tpu_custom_call.1} parent=23 // pred_check_branch
          %177 = sbr.rel (%p175) target = $region44
        $region43: #{tpu_custom_call.1} parent=23 // pred_region
          _
        $region44: #{tpu_custom_call.1} parent=23 // pred_fallthru
          _
        // Predicated region
        $region45: #{tpu_custom_call.1} parent=23 // pred_check
          %p178 = pneg %p77
        $region46: #{tpu_custom_call.1} parent=23 // pred_check_branch
          %180 = sbr.rel (%p178) target = $region48
        $region47: #{tpu_custom_call.1} parent=23 // pred_region
          _
        $region48: #{tpu_custom_call.1} parent=23 // pred_fallthru
          _
      $region24: #{tpu_custom_call.1} parent=5 // pred_fallthru
        _
      %p181 = scmp.le.s32.totalorder 2, %s12
      // Predicated region
      $region49: #{tpu_custom_call.1} parent=5 // pred_check
        %p182 = pneg %p181
      $region50: #{tpu_custom_call.1} parent=5 // pred_check_branch
        %184 = sbr.rel (%p182) target = $region52
      $region51: #{tpu_custom_call.1} parent=5 // pred_region
        %s185 = ssub.s32 %s12, 2
      $region52: #{tpu_custom_call.1} parent=5 // pred_fallthru
        _
    $region6: #{tpu_custom_call.1} parent=1 // loop_footer
      %s16 = sadd.s32 1, %s12
    $region7: #{tpu_custom_call.1} parent=1 // loop_footer_branch
      %11 = sbr.rel target = $region3
    $region8: #{tpu_custom_call.1} parent=1 // loop_exit
      _
    %186 = vsyncpa [#allocation3], 1
    %s187 = scalar_lea.sflag [#allocation3], 1
    %188 = vsyncpa %s187, 1

</llo_original>
